<compile_context>
chip_gen: v7x
topology: tpu7x:2x2x1
jax: 0.10.0
libtpu: 0.0.40
codegen_flags: <defaults>
</compile_context>

<pallas_src>
import functools

import jax
import jax.numpy as jnp
from jax.experimental import pallas as pl
from jax.experimental.pallas import tpu as pltpu


# --------------------------------------------------------------------------- #
# VMEM budgets (generation aware)                                              #
# --------------------------------------------------------------------------- #

@functools.lru_cache(maxsize=1)
def _vmem_budget_and_limit():
    """(working-set budget, vmem_limit_bytes) derived from the chip's VMEM size.

    v5e/v6e (128 MiB VMEM) -> ~80 MiB budget / 96 MiB limit;
    v7x (64 MiB per TensorCore) -> ~40 MiB budget / 48 MiB limit.
    Falls back to the conservative v7x numbers if the query is unavailable.
    """
    try:
        capacity = int(pltpu.get_tpu_info().vmem_capacity_bytes)
    except Exception:
        capacity = 64 * 1024 * 1024
    limit = (capacity * 3) // 4
    budget = (capacity * 5) // 8
    return budget, limit


def _onehot_working_set(blk, vocab_pad, d_pad, w_isz, out_isz):
    """VMEM working-set estimate for the one-hot path (per grid step)."""
    # TODO(synk): the constant-index table block is still double-buffered;
    # pipeline_mode=pl.Buffered(1) would halve this term but is left out pending
    # robust lowering support -- it is accounted as 2x here so we never overshoot.
    tables = 2 * vocab_pad * d_pad * w_isz        # fused table block, double-buffered
    ids = 2 * blk * 128 * 4                       # (blk, 1) int32 tile lane-pads to 128
    outs = 2 * blk * d_pad * out_isz              # output tiles, double-buffered
    onehot = blk * vocab_pad * (4 + w_isz)        # int32 iota + one-hot in table dtype
    acc = blk * d_pad * 4                         # f32 matmul result before the cast
    return tables + ids + outs + onehot + acc


def _choose_block(n, cap):
    """Pick (blk, n_pad): blk % 8 == 0, n_pad % blk == 0, n_pad >= n.

    Prefers >= 2 blocks (both v7x TensorCores get work) and exact divisors of
    the sublane-padded token count (avoids a post-kernel slice -> extra HBM copy).
    """
    cap = max(8, (int(cap) // 8) * 8)
    n8 = pl.cdiv(n, 8) * 8
    if n8 <= 8:
        return 8, 8
    # v7x megacore: give the 'parallel' grid axis at least two blocks when possible.
    cap = min(cap, max(8, (n8 // 2) // 8 * 8))
    # Prefer an exact divisor of n8 near cap (at most halving the tile).
    floor = max(8, cap // 2)
    blk = cap
    while blk >= floor:
        if n8 % blk == 0:
            return blk, n8
        blk -= 8
    return cap, pl.cdiv(n8, cap) * cap


# --------------------------------------------------------------------------- #
# Path 1: fused one-hot MXU gather (small vocab, tables VMEM-resident)         #
# --------------------------------------------------------------------------- #

def _onehot_kernel(ids_ref, tbl_ref, out_ref):
    ids = ids_ref[...]                              # (blk, 1) int32
    blk = ids.shape[0]
    vocab_pad = tbl_ref.shape[0]
    # One-hot rows select concat(A, B)[id]; rows whose id is out of range are
    # all-zero (documented contract).
    iota = jax.lax.broadcasted_iota(jnp.int32, (blk, vocab_pad), 1)
    onehot = (iota == ids).astype(tbl_ref.dtype)    # (blk, vocab_pad)
    # TODO(synk): if bundle dumps show vld/vst pressure from materializing the
    # (blk, vocab) one-hot, tile the vocab/K dim with an unrolled fori_loop.
    out_ref[...] = jnp.dot(onehot, tbl_ref[...],
                           preferred_element_type=jnp.float32).astype(out_ref.dtype)


def _onehot_forward(flat_ids, weights_a, weights_b, out_dtype, block_t,
                    budget, limit, vocab_pad, d_pad):
    n = flat_ids.shape[0]
    num_a, d = weights_a.shape
    num_b = weights_b.shape[0]
    vocab = num_a + num_b
    w_isz = jnp.dtype(weights_a.dtype).itemsize
    out_isz = jnp.dtype(out_dtype).itemsize

    # Fused table: concat(A, B), rows padded to a multiple of 8, embedding dim
    # padded to a multiple of 128 so output stores are lane-dense (no vst.msk).
    tbl = jnp.concatenate([weights_a, weights_b], axis=0)
    if vocab_pad != vocab or d_pad != d:
        tbl = jnp.pad(tbl, ((0, vocab_pad - vocab), (0, d_pad - d)))

    cap = max(8, (int(block_t) // 8) * 8)
    while cap > 8 and _onehot_working_set(cap, vocab_pad, d_pad, w_isz, out_isz) > budget:
        cap = max(8, (cap // 2 // 8) * 8)
    blk, n_pad = _choose_block(n, cap)

    ids = flat_ids
    if n_pad != n:
        ids = jnp.pad(ids, (0, n_pad - n))          # padded ids = 0 -> valid row-0 lookup
    ids = ids.reshape(n_pad, 1)

    out = pl.pallas_call(
        _onehot_kernel,
        out_shape=jax.ShapeDtypeStruct((n_pad, d_pad), out_dtype),
        grid_spec=pltpu.PrefetchScalarGridSpec(
            num_scalar_prefetch=0,
            grid=(n_pad // blk,),
            in_specs=[
                pl.BlockSpec((blk, 1), lambda i: (i, 0)),            # ids tile
                pl.BlockSpec((vocab_pad, d_pad), lambda i: (0, 0)),  # fused table (VMEM)
            ],
            out_specs=pl.BlockSpec((blk, d_pad), lambda i: (i, 0)),
        ),
        compiler_params=pltpu.CompilerParams(
            dimension_semantics=("parallel",),
            vmem_limit_bytes=limit,
        ),
    )(ids, tbl)

    if n_pad != n:
        out = out[:n]
    if d_pad != d:
        out = out[:, :d]
    return out


# --------------------------------------------------------------------------- #
# Path 2: DMA row-gather (large vocab, tables stay in HBM)                     #
# --------------------------------------------------------------------------- #

def _gather_kernel(num_a, ids_ref, wa_ref, wb_ref, out_ref, gbuf, sem):
    # ids_ref : SMEM (n_pad,) int32  (scalar-prefetched)
    # wa_ref/wb_ref : HBM tables (memory_space=ANY)
    # gbuf : VMEM (blk, d) gather buffer ; sem : 2 DMA semaphores (double-buffer)
    blk = out_ref.shape[0]
    base = pl.program_id(0) * blk

    def issue(t, slot):
        row = ids_ref[base + t]

        @pl.when(row < num_a)
        def _():
            pltpu.make_async_copy(wa_ref.at[row], gbuf.at[t], sem.at[slot]).start()

        @pl.when(row >= num_a)
        def _():
            pltpu.make_async_copy(wb_ref.at[row - num_a], gbuf.at[t], sem.at[slot]).start()

    issue(0, 0)

    def body(t, carry):
        slot = t % 2

        @pl.when(t + 1 < blk)
        def _():
            issue(t + 1, 1 - slot)      # prefetch next row while waiting current

        # Wait descriptor only needs matching transfer size (same (d,) row shape).
        pltpu.make_async_copy(wa_ref.at[0], gbuf.at[t], sem.at[slot]).wait()
        return carry

    jax.lax.fori_loop(0, blk, body, 0)
    out_ref[...] = gbuf[...].astype(out_ref.dtype)


def _gather_forward(flat_ids, weights_a, weights_b, out_dtype, block_t, limit):
    n = flat_ids.shape[0]
    num_a, d = weights_a.shape
    num_b = weights_b.shape[0]
    w_dtype = weights_a.dtype

    # Empty slices would make a zero-sized HBM operand; pad to one (never-read) row.
    wa = weights_a if num_a > 0 else jnp.zeros((1, d), w_dtype)
    wb = weights_b if num_b > 0 else jnp.zeros((1, d), w_dtype)

    cap = min(max(8, (int(block_t) // 8) * 8), 512)
    blk, n_pad = _choose_block(n, cap)

    ids = flat_ids
    if n_pad != n:
        ids = jnp.pad(ids, (0, n_pad - n))

    # TODO(synk): the full id vector is scalar-prefetched into SMEM; for very large
    # token counts, tile the gather over an outer wrapper loop (SMEM capacity).
    # TODO(synk): only 2 row-DMAs are kept in flight; deepen for more overlap.
    kernel = functools.partial(_gather_kernel, num_a)

    out = pl.pallas_call(
        kernel,
        out_shape=jax.ShapeDtypeStruct((n_pad, d), out_dtype),
        grid_spec=pltpu.PrefetchScalarGridSpec(
            num_scalar_prefetch=1,
            grid=(n_pad // blk,),
            in_specs=[
                pl.BlockSpec(memory_space=pl.ANY),   # table A stays in HBM
                pl.BlockSpec(memory_space=pl.ANY),   # table B stays in HBM
            ],
            out_specs=pl.BlockSpec((blk, d), lambda i, _ids: (i, 0)),
            scratch_shapes=[
                pltpu.VMEM((blk, d), w_dtype),
                pltpu.SemaphoreType.DMA((2,)),
            ],
        ),
        compiler_params=pltpu.CompilerParams(
            dimension_semantics=("parallel",),
            vmem_limit_bytes=limit,
        ),
    )(ids, wa, wb)

    if n_pad != n:
        out = out[:n]
    return out


# --------------------------------------------------------------------------- #
# Public wrapper                                                               #
# --------------------------------------------------------------------------- #

@functools.partial(jax.jit, static_argnames=("block_t", "out_dtype",
                                             "force_gather", "onehot_max_vocab"))
def sliced_embedding_forward(batch_ids, weights_a, weights_b, *,
                             block_t=1024, out_dtype=None,
                             force_gather=False, onehot_max_vocab=2048):
    """Pallas implementation of SlicedEmbedding.forward.

    batch_ids : int array of token ids in [0, num_a + num_b), any shape
    weights_a : (num_a, D) first embedding slice
    weights_b : (num_b, D) second embedding slice
    returns   : batch_ids.shape + (D,) in `out_dtype` (defaults to weights dtype)
    """
    num_a, d = weights_a.shape
    num_b, d2 = weights_b.shape
    assert d == d2, "embedding dims of the two slices must match"
    assert weights_a.dtype == weights_b.dtype, "slices must share a dtype"
    vocab = num_a + num_b
    if vocab == 0:
        raise ValueError("both embedding slices are empty")
    out_dtype = weights_a.dtype if out_dtype is None else jnp.dtype(out_dtype)

    w_isz = jnp.dtype(weights_a.dtype).itemsize
    out_isz = jnp.dtype(out_dtype).itemsize
    budget, limit = _vmem_budget_and_limit()

    orig_shape = batch_ids.shape
    n = 1
    for s in orig_shape:
        n *= int(s)
    flat = batch_ids.reshape(n).astype(jnp.int32)

    vocab_pad = pl.cdiv(vocab, 8) * 8
    d_pad = max(128, pl.cdiv(d, 128) * 128)

    # The one-hot path's VPU/MXU work scales with tokens x vocab, so it is gated
    # on vocab size as well as on the (generation-aware) VMEM budget.
    use_gather = (
        force_gather
        or vocab_pad > onehot_max_vocab
        or _onehot_working_set(8, vocab_pad, d_pad, w_isz, out_isz) > budget
    )

    if use_gather:
        out_flat = _gather_forward(flat, weights_a, weights_b, out_dtype,
                                   block_t, limit)
    else:
        out_flat = _onehot_forward(flat, weights_a, weights_b, out_dtype,
                                   block_t, budget, limit, vocab_pad, d_pad)

    return out_flat.reshape(orig_shape + (d,))


# --------------------------------------------------------------------------- #
# Self-test                                                                    #
# --------------------------------------------------------------------------- #

if __name__ == "__main__":
    key = jax.random.PRNGKey(0)
    k_a, k_b, k_ids = jax.random.split(key, 3)

    # Small synthetic shapes: vocab split 12 + 20, embedding_dim = 32.
    num_a, num_b, dim = 12, 20, 32
    batch, seq = 2, 8

    weights_a = jax.random.normal(k_a, (num_a, dim), dtype=jnp.float32)
    weights_b = jax.random.normal(k_b, (num_b, dim), dtype=jnp.float32)
    batch_ids = jax.random.randint(k_ids, (batch, seq), 0, num_a + num_b,
                                   dtype=jnp.int32)

    # Pure-JAX reference for the same forward semantics.
    mask = batch_ids >= num_a
    ids_a = jnp.where(mask, 0, batch_ids)
    ids_b = jnp.where(mask, batch_ids - num_a, 0)
    ref = jnp.where(mask[..., None], weights_b[ids_b], weights_a[ids_a])

    # Default (small-vocab) one-hot MXU path.
    out = sliced_embedding_forward(batch_ids, weights_a, weights_b)
    out = jax.block_until_ready(out)
    assert out.shape == (batch, seq, dim)
    assert jnp.allclose(out, ref, atol=1e-5), "one-hot path mismatch vs reference"

    # Large-vocab DMA row-gather path, forced on the same small inputs.
    out_g = sliced_embedding_forward(batch_ids, weights_a, weights_b,
                                     force_gather=True)
    out_g = jax.block_until_ready(out_g)
    assert out_g.shape == (batch, seq, dim)
    assert jnp.allclose(out_g, ref, atol=1e-5), "gather path mismatch vs reference"

    print("KERNEL_OK")
</pallas_src>

<mosaic_0001>
module attributes {stable_mosaic.version = 11 : i64} {
  func.func @_onehot_kernel(%arg0: i32, %arg1: memref<8x1xi32, #tpu.memory_space<vmem>>, %arg2: memref<32x128xf32, #tpu.memory_space<vmem>>, %arg3: memref<8x128xf32, #tpu.memory_space<vmem>>) attributes {dimension_semantics = [#tpu.dimension_semantics<parallel>], iteration_bounds = array<i64: 2>, scalar_prefetch = 0 : i64, scratch_operands = 0 : i64, tpu.core_type = #tpu.core_type<tc>, window_params = [{transform_indices = @transform_0, window_bounds = array<i64: 8, 1>}, {pipeline_mode = #tpu.pipeline_mode<synchronous>, transform_indices = @transform_1, window_bounds = array<i64: 32, 128>}, {transform_indices = @transform_2, window_bounds = array<i64: 8, 128>}]} {
    %c0 = arith.constant 0 : index
    %c0_0 = arith.constant 0 : index
    %0 = vector.load %arg1[%c0, %c0_0] : memref<8x1xi32, #tpu.memory_space<vmem>>, vector<8x1xi32>
    %1 = tpu.iota {dimensions = array<i32: 1>} : vector<8x32xi32>
    %2 = vector.broadcast %0 : vector<8x1xi32> to vector<8x32xi32>
    %3 = arith.cmpi eq, %1, %2 : vector<8x32xi32>
    %4 = arith.extui %3 : vector<8x32xi1> to vector<8x32xi32>
    %5 = arith.sitofp %4 : vector<8x32xi32> to vector<8x32xf32>
    %c0_1 = arith.constant 0 : index
    %c0_2 = arith.constant 0 : index
    %6 = vector.load %arg2[%c0_1, %c0_2] : memref<32x128xf32, #tpu.memory_space<vmem>>, vector<32x128xf32>
    %cst = arith.constant dense<0.000000e+00> : vector<8x128xf32>
    %7 = tpu.matmul %5, %6, %cst {dimension_numbers = #tpu.dot_dimension_numbers<[1], [0], [0], [1], [0, 0, 1, 1], [], []>} : vector<8x32xf32>, vector<32x128xf32>, vector<8x128xf32> -> vector<8x128xf32>
    %c0_3 = arith.constant 0 : index
    %c0_4 = arith.constant 0 : index
    %8 = vector.load %arg3[%c0_3, %c0_4] : memref<8x128xf32, #tpu.memory_space<vmem>>, vector<8x128xf32>
    tpu.vector_store %arg3[%c0_3, %c0_4], %7 {strides = array<i32>} : memref<8x128xf32, #tpu.memory_space<vmem>>, vector<8x128xf32>,
    return
  }
  func.func @transform_0(%arg0: i32) -> (i32, i32) {
    %c0_i32 = arith.constant 0 : i32
    %c0_i32_0 = arith.constant 0 : i32
    return %arg0, %c0_i32 : i32, i32
  }
  func.func @transform_1(%arg0: i32) -> (i32, i32) {
    %c0_i32 = arith.constant 0 : i32
    %c0_i32_0 = arith.constant 0 : i32
    %c0_i32_1 = arith.constant 0 : i32
    return %c0_i32, %c0_i32_0 : i32, i32
  }
  func.func @transform_2(%arg0: i32) -> (i32, i32) {
    %c0_i32 = arith.constant 0 : i32
    %c0_i32_0 = arith.constant 0 : i32
    return %arg0, %c0_i32 : i32, i32
  }
}

</mosaic_0001>

<llo_original>
// kernel: sliced_embedding_forward.1
$region0: #{sliced_embedding_forward.1}
  #allocation0 [shape = 'u32[]', space=smem, size = 0x4, offset = 0x4, fixed_abs, tag = 'smem constant byte address 0x4 - core index']
  #allocation1 [shape = 'u32[144,128]{1,0:T(1,128)}', space=vmem, size = 0x12000, scoped, tag = 'internal scratch']
  %s0 = inlined_call_operand.vmem [shape: s32[16,1], index: 0, kind: input, shape index: {}]
  %s1 = inlined_call_operand.vmem [shape: f32[32,128], index: 1, kind: input, shape index: {}]
  %s2 = inlined_call_operand.vmem [shape: f32[16,128], index: 2, kind: output, shape index: {}]
  %s3 = sld [smem:[#allocation0]]
  $region41: #{sliced_embedding_forward.1} parent=0
    _
  %s5 = ssub.s32 1, %s3
  %s6 = scalar_select 0, %s5, %s3
  loop: start=0, step=1, limit=4
  $region2: #{sliced_embedding_forward.1} parent=0 // loop_pre_header
    _
  $region3: #{sliced_embedding_forward.1} parent=0 // loop_header
    %s8 = sphi 0, %s12
    %p9 = scmp.ge.s32.totalorder %s8, 4
    %s18 = sphi 0, %s20
    %s21 = sphi 0, %s18
    %s22 = sphi 0, %s21
    %s38 = sphi 0, %s22
    %s42 = sphi 0, %s42
    %s44 = sphi 0, %s42
    %s45 = sphi 0, %s44
    %s59 = sphi 0, %s45
    %s65 = sphi 0, %s67
    %s68 = sphi 0, %s65
    %s69 = sphi 0, %s68
    %s85 = sphi 0, %s69
  $region4: #{sliced_embedding_forward.1} parent=0 // loop_header_branch
    %11 = sbr.rel (%p9) target = $region8
  $region5: #{sliced_embedding_forward.1} parent=0 // loop_body
    %s13 = ssub.s32 %s8, 1
    %s14 = ssub.s32 %s8, 2
    %s15 = sadd.s32 %s8, 1
    %s16 = ssub.s32 %s8, %s15
    %p17 = scmp.eq.s32.totalorder %s16, 0
    %s19 = sadd.s32 %s18, 1
    %s20 = scalar_select %p17, %s18, %s19
    %p23 = pneg %p17
    %p24 = scmp.eq.s32.totalorder %s8, 1
    %p25 = por %p23, %p24
    %p26 = scmp.ne.s32.totalorder %s18, %s21
    %p27 = scmp.eq.s32.totalorder %s8, 0
    %p28 = por %p26, %p27
    %p29 = scmp.ne.s32.totalorder %s18, %s21
    %p30 = scmp.eq.s32.totalorder %s13, 1
    %p31 = por %p29, %p30
    %p32 = scmp.ne.s32.totalorder %s21, %s22
    %p33 = scmp.eq.s32.totalorder %s13, 0
    %p34 = por %p32, %p33
    %p35 = scmp.ne.s32.totalorder %s21, %s22
    %p36 = scmp.eq.s32.totalorder %s14, 1
    %p37 = por %p35, %p36
    %p39 = scmp.ne.s32.totalorder %s22, %s38
    %p40 = scmp.eq.s32.totalorder %s14, 0
    %p41 = por %p39, %p40
    %s43 = sadd.s32 %s42, 1
    %p46 = scmp.eq.s32.totalorder %s8, 1
    %p47 = scmp.ne.s32.totalorder %s42, %s44
    %p48 = scmp.eq.s32.totalorder %s8, 0
    %p49 = por %p47, %p48
    %p50 = scmp.ne.s32.totalorder %s42, %s44
    %p51 = scmp.eq.s32.totalorder %s13, 1
    %p52 = por %p50, %p51
    %p53 = scmp.ne.s32.totalorder %s44, %s45
    %p54 = scmp.eq.s32.totalorder %s13, 0
    %p55 = por %p53, %p54
    %p56 = scmp.ne.s32.totalorder %s44, %s45
    %p57 = scmp.eq.s32.totalorder %s14, 1
    %p58 = por %p56, %p57
    %p60 = scmp.ne.s32.totalorder %s45, %s59
    %p61 = scmp.eq.s32.totalorder %s14, 0
    %p62 = por %p60, %p61
    %s63 = ssub.s32 %s8, %s15
    %p64 = scmp.eq.s32.totalorder %s63, 0
    %s66 = sadd.s32 %s65, 1
    %s67 = scalar_select %p64, %s65, %s66
    %p70 = pneg %p64
    %p71 = scmp.eq.s32.totalorder %s8, 1
    %p72 = por %p70, %p71
    %p73 = scmp.ne.s32.totalorder %s65, %s68
    %p74 = scmp.eq.s32.totalorder %s8, 0
    %p75 = por %p73, %p74
    %p76 = scmp.ne.s32.totalorder %s65, %s68
    %p77 = scmp.eq.s32.totalorder %s13, 1
    %p78 = por %p76, %p77
    %p79 = scmp.ne.s32.totalorder %s68, %s69
    %p80 = scmp.eq.s32.totalorder %s13, 0
    %p81 = por %p79, %p80
    %p82 = scmp.ne.s32.totalorder %s68, %s69
    %p83 = scmp.eq.s32.totalorder %s14, 1
    %p84 = por %p82, %p83
    %p86 = scmp.ne.s32.totalorder %s69, %s85
    %p87 = scmp.eq.s32.totalorder %s14, 0
    %p88 = por %p86, %p87
    %p89 = scmp.le.s32.totalorder 1, %s8
    %p90 = scmp.lt.s32.totalorder %s8, 3
    %p91 = pnand %p89, %p90
    %p92 = pneg %p91
    // Predicated region
    $region9: #{sliced_embedding_forward.1} parent=5 // pred_check
      _
    $region10: #{sliced_embedding_forward.1} parent=5 // pred_check_branch
      %94 = sbr.rel (%p91) target = $region12
    $region11: #{sliced_embedding_forward.1} parent=5 // pred_region
      %s95 = ssub.s32 %s8, 1
      // Predicated region
      $region13: #{sliced_embedding_forward.1} parent=11 // pred_check
        %p96 = pneg %p55
      $region14: #{sliced_embedding_forward.1} parent=11 // pred_check_branch
        %98 = sbr.rel (%p96) target = $region16
      $region15: #{sliced_embedding_forward.1} parent=11 // pred_region
        _
      $region16: #{sliced_embedding_forward.1} parent=11 // pred_fallthru
        _
    $region12: #{sliced_embedding_forward.1} parent=5 // pred_fallthru
      _
    %p99 = scmp.lt.s32.totalorder %s8, 2
    // Predicated region
    $region17: #{sliced_embedding_forward.1} parent=5 // pred_check
      %p100 = pneg %p99
    $region18: #{sliced_embedding_forward.1} parent=5 // pred_check_branch
      %102 = sbr.rel (%p100) target = $region20
    $region19: #{sliced_embedding_forward.1} parent=5 // pred_region
      // Predicated region
      $region21: #{sliced_embedding_forward.1} parent=19 // pred_check
        %p103 = pneg %p28
      $region22: #{sliced_embedding_forward.1} parent=19 // pred_check_branch
        %105 = sbr.rel (%p103) target = $region24
      $region23: #{sliced_embedding_forward.1} parent=19 // pred_region
        %p106 = scmp.lt.s32.totalorder %s8, 1
        %s107 = scalar_select %p106, %s8, 1
        %s108 = smul.addr %s107, 8
        %s109 = scalar_lea.vmem %s0, %s108
      $region24: #{sliced_embedding_forward.1} parent=19 // pred_fallthru
        _
    $region20: #{sliced_embedding_forward.1} parent=5 // pred_fallthru
      _
    %p110 = scmp.le.s32.totalorder 1, %s8
    %p111 = scmp.lt.s32.totalorder %s8, 3
    %p112 = pnand %p110, %p111
    %p113 = pneg %p112
    // Predicated region
    $region25: #{sliced_embedding_forward.1} parent=5 // pred_check
      _
    $region26: #{sliced_embedding_forward.1} parent=5 // pred_check_branch
      %115 = sbr.rel (%p112) target = $region28
    $region27: #{sliced_embedding_forward.1} parent=5 // pred_region
      %s116 = ssub.s32 %s8, 1
      %p117 = scmp.lt.s32.totalorder %s13, 1
      %s118 = scalar_select %p117, %s13, 1
      %s119 = smul.addr %s118, 8
      %s120 = scalar_lea.vmem %s0, %s119
      %p121 = pneg %p34
      %p122 = pneg %p31
      %p123 = pneg %p55
      %p124 = pneg %p52
      %p125 = pneg %p81
      %p126 = pneg %p78
      %p127 = scmp.lt.s32.totalorder %s13, 1
      %s128 = scalar_select %p127, %s13, 1
      %s129 = smul.addr %s128, 8
      %s130 = scalar_lea.vmem %s2, %s129
      %p131 = scmp.lt.s32.totalorder %s13, 1
      %s132 = scalar_select %p131, %s13, 1
      %s133 = smul.addr %s132, 8
      %s134 = scalar_lea.vmem %s0, %s133
      %p135 = scmp.lt.s32.totalorder %s13, 1
      %s136 = scalar_select %p135, %s13, 1
      %s137 = smul.addr %s136, 8
      %s138 = scalar_lea.vmem %s2, %s137
      %v139 = vld [vmem:[%s134] sm:$0xff]
      %v140 = vlaneseq
      %v141 = vand.u32 %v140, 127
      %142 = vset.pattern.permute.xlu0 0
      %143 = vperm.xlu0 %142, %v139
      %v144 = vpop.permute.xlu0 %143
      %vm145 = vcmp.eq.s32.totalorder %v141, %v144
      %v146 = vsel %vm145, 1, 0
      %v147 = vcvt.s32.f32 %v146
      %v148 = vld [vmem:[%s1] sm:$0xff]
      %v149 = vld [vmem:[%s1 + $0x8] sm:$0xff]
      %v150 = vld [vmem:[%s1 + $0x10] sm:$0xff]
      %v151 = vld [vmem:[%s1 + $0x18] sm:$0xff]
      %vm152 = vcmask 261120
      %v154 = vsel %vm152, %v147, 0
      %156 = vmatprep.subr.mxu0 0.0
      %157 = vmatpush1.msra.mxu0 %v148
      %158 = vmatprep.subr.mxu0 0.0
      %159 = vmatpush1.msra.mxu0 %v149
      %160 = vmatprep.subr.mxu0 0.0
      %161 = vmatpush1.msra.mxu0 %v150
      %162 = vmatprep.subr.mxu0 0.0
      %163 = vmatpush1.msra.mxu0 %v151
      %164 = vmatprep.subr.mxu0 0.0
      %165 = vmatpush1.msra.mxu0 0.0
      %166 = vmatprep.subr.mxu0 0.0
      %167 = vmatpush1.msra.mxu0 0.0
      %168 = vmatprep.subr.mxu0 0.0
      %169 = vmatpush1.msra.mxu0 0.0
      %170 = vmatprep.subr.mxu0 0.0
      %171 = vmatpush1.msra.mxu0 0.0
      %172 = vmatprep.subr.mxu0 0.0
      %173 = vmatpush1.msra.mxu0 0.0
      %174 = vmatprep.subr.mxu0 0.0
      %175 = vmatpush1.msra.mxu0 0.0
      %176 = vmatprep.subr.mxu0 0.0
      %177 = vmatpush1.msra.mxu0 0.0
      %178 = vmatprep.subr.mxu0 0.0
      %179 = vmatpush1.msra.mxu0 0.0
      %180 = vmatprep.subr.mxu0 0.0
      %181 = vmatpush1.msra.mxu0 0.0
      %182 = vmatprep.subr.mxu0 0.0
      %183 = vmatpush1.msra.mxu0 0.0
      %184 = vmatprep.subr.mxu0 0.0
      %185 = vmatpush1.msra.mxu0 0.0
      %186 = vmatprep.subr.mxu0 0.0
      %187 = vmatpush1.msra.mxu0 0.0
      %188 = vmatprep.subr.mxu0 0.0
      %189 = vmatpush1.msra.mxu0 0.0
      %190 = vmatprep.subr.mxu0 0.0
      %191 = vmatpush1.msra.mxu0 0.0
      %192 = vmatprep.subr.mxu0 0.0
      %193 = vmatpush1.msra.mxu0 0.0
      %194 = vmatprep.subr.mxu0 0.0
      %195 = vmatpush1.msra.mxu0 0.0
      %196 = vmatprep.subr.mxu0 0.0
      %197 = vmatpush1.msra.mxu0 0.0
      %198 = vmatprep.subr.mxu0 0.0
      %199 = vmatpush1.msra.mxu0 0.0
      %200 = vmatprep.subr.mxu0 0.0
      %201 = vmatpush1.msra.mxu0 0.0
      %202 = vmatprep.subr.mxu0 0.0
      %203 = vmatpush1.msra.mxu0 0.0
      %204 = vmatprep.subr.mxu0 0.0
      %205 = vmatpush1.msra.mxu0 0.0
      %206 = vmatprep.subr.mxu0 0.0
      %207 = vmatpush1.msra.mxu0 0.0
      %208 = vmatprep.subr.mxu0 0.0
      %209 = vmatpush1.msra.mxu0 0.0
      %210 = vmatprep.subr.mxu0 0.0
      %211 = vmatpush1.msra.mxu0 0.0
      %212 = vmatprep.subr.mxu0 0.0
      %213 = vmatpush1.msra.mxu0 0.0
      %214 = vmatprep.subr.mxu0 0.0
      %215 = vmatpush1.msra.mxu0 0.0
      %216 = vmatprep.subr.mxu0 0.0
      %217 = vmatpush1.msra.mxu0 0.0
      %218 = vmatprep.subr.mxu0 0.0
      %219 = vmatpush1.msra.mxu0 0.0
      %220 = vmatprep.mubr.f32.mxu0 0.0
      %221 = vmatmul.mubr.f32.gmra.mrb[0].mxu0 %v154
      %v222 = vpop.f32.mrb[0].mxu0
      %v223 = vadd.f32 0.0, %v222
      %v224 = vpop.f32.mrb[0].mxu0
      %225 = vdwg.mxu0
      %226 = vst [vmem:[%s138] sm:$0xff] %v223
      %p227 = scmp.lt.s32.totalorder %s13, 1
      %s228 = scalar_select %p227, %s13, 1
      %s229 = smul.addr %s228, 8
      %s230 = scalar_lea.vmem %s2, %s229
      // Predicated region
      $region29: #{sliced_embedding_forward.1} parent=27 // pred_check
        %p231 = pneg %p78
      $region30: #{sliced_embedding_forward.1} parent=27 // pred_check_branch
        %233 = sbr.rel (%p231) target = $region32
      $region31: #{sliced_embedding_forward.1} parent=27 // pred_region
        _
      $region32: #{sliced_embedding_forward.1} parent=27 // pred_fallthru
        _
    $region28: #{sliced_embedding_forward.1} parent=5 // pred_fallthru
      _
    %p234 = scmp.le.s32.totalorder 2, %s8
    // Predicated region
    $region33: #{sliced_embedding_forward.1} parent=5 // pred_check
      %p235 = pneg %p234
    $region34: #{sliced_embedding_forward.1} parent=5 // pred_check_branch
      %237 = sbr.rel (%p235) target = $region36
    $region35: #{sliced_embedding_forward.1} parent=5 // pred_region
      %s238 = ssub.s32 %s8, 2
      // Predicated region
      $region37: #{sliced_embedding_forward.1} parent=35 // pred_check
        %p239 = pneg %p84
      $region38: #{sliced_embedding_forward.1} parent=35 // pred_check_branch
        %241 = sbr.rel (%p239) target = $region40
      $region39: #{sliced_embedding_forward.1} parent=35 // pred_region
        %p242 = scmp.lt.s32.totalorder %s14, 1
        %s243 = scalar_select %p242, %s14, 1
        %s244 = smul.addr %s243, 8
        %s245 = scalar_lea.vmem %s2, %s244
      $region40: #{sliced_embedding_forward.1} parent=35 // pred_fallthru
        _
    $region36: #{sliced_embedding_forward.1} parent=5 // pred_fallthru
      _
  $region6: #{sliced_embedding_forward.1} parent=0 // loop_footer
    %s12 = sadd.s32 1, %s8
  $region7: #{sliced_embedding_forward.1} parent=0 // loop_footer_branch
    %7 = sbr.rel target = $region3
  $region8: #{sliced_embedding_forward.1} parent=0 // loop_exit
    _

</llo_original>
